<compile_context>
chip_gen: v6e
topology: v6e:2x2x1
jax: 0.10.0
libtpu: 0.0.40
codegen_flags: <defaults>
</compile_context>

<pallas_src>
import functools

import jax
import jax.numpy as jnp
from jax import lax
from jax.experimental import pallas as pl
from jax.experimental.pallas import tpu as pltpu


def _round_up(a, m):
    return ((a + m - 1) // m) * m


def _vq_kernel(x_ref, emb_ref, hesq_ref, q_ref, stats_ref, *,
               n_valid, block_n, v_total, v_chunk, use_bf16):
    # x_ref:     (1, C, tn)   input tile (channels on sublanes, positions on lanes)
    # emb_ref:   (V, H)       full codebook, resident & single-buffered (H == C)
    # hesq_ref:  (V, 1)       precomputed 0.5*||e_v||^2
    # q_ref:     (1, C, tn)   quantized output tile (lane-dense)
    # stats_ref: (1, V+1, 1)  rows 0..V-1: per-code counts, row V: tile SSE
    tn = block_n
    ragged = (n_valid % tn) != 0
    mm_dtype = jnp.bfloat16 if use_bf16 else jnp.float32

    x = x_ref[0]                                   # (C, tn) f32
    x_mm = x.astype(mm_dtype)
    chunks = [(off, min(v_chunk, v_total - off))
              for off in range(0, v_total, v_chunk)]

    # ---- Phase A: streaming argmin over codebook chunks (bounded temps). ----
    run_min = jnp.full((1, tn), jnp.inf, dtype=jnp.float32)
    run_idx = jnp.full((1, tn), v_total, dtype=jnp.int32)
    for off, vc in chunks:
        e_c = emb_ref[off:off + vc, :]                              # (vc, H)
        # scores[v, j] = e[v]·x[:, j] on the MXU (bf16 operands, f32 accum).
        xe = jnp.dot(e_c.astype(mm_dtype), x_mm,
                     preferred_element_type=jnp.float32)            # (vc, tn)
        d = hesq_ref[off:off + vc, :] - xe          # 0.5||e||^2 - e·x (argmin-equiv)
        iota = lax.broadcasted_iota(jnp.int32, (vc, tn), 0) + off
        cmin = jnp.min(d, axis=0, keepdims=True)                    # (1, tn)
        # first index achieving the chunk min (matches torch.argmin ties)
        cidx = jnp.min(jnp.where(d == cmin, iota, v_total),
                       axis=0, keepdims=True)
        better = cmin < run_min                     # strict: earlier chunk wins ties
        run_idx = jnp.where(better, cidx, run_idx)
        run_min = jnp.where(better, cmin, run_min)

    # Column validity for the ragged last tile (OOB lanes hold garbage reads).
    if ragged:
        col0 = pl.program_id(1) * tn
        valid_lane = (lax.broadcasted_iota(jnp.int32, (1, tn), 1) + col0) < n_valid
        ones_col = ((lax.broadcasted_iota(jnp.int32, (tn, 1), 0) + col0)
                    < n_valid).astype(jnp.float32)                  # (tn, 1)
    else:
        valid_lane = None
        ones_col = jnp.ones((tn, 1), dtype=jnp.float32)

    # ---- Phase B: codebook lookup + per-code counts, chunk by chunk. ----
    c = x.shape[0]
    q = jnp.zeros((c, tn), dtype=jnp.float32)
    for off, vc in chunks:
        e_c = emb_ref[off:off + vc, :]
        iota = lax.broadcasted_iota(jnp.int32, (vc, tn), 0) + off
        enc_f = (iota == run_idx).astype(jnp.float32)               # (vc, tn) one-hot
        # quantized[h, j] += sum_v e[v, h] * enc[v, j]  (MXU, no e.T materialized)
        q = q + lax.dot_general(e_c.astype(mm_dtype), enc_f.astype(mm_dtype),
                                (((0,), (0,)), ((), ())),
                                preferred_element_type=jnp.float32)  # (C, tn)
        # Counts on the MXU (keeps the lane reduction off the loaded XLU);
        # the ragged-column mask is folded into ones_col. Stored V-on-sublanes.
        cnt_c = jnp.dot(enc_f, ones_col, preferred_element_type=jnp.float32)
        stats_ref[0, off:off + vc, :] = cnt_c                       # (vc, 1)

    q_ref[...] = q[None].astype(q_ref.dtype)

    diff = q - x
    if ragged:
        # where (not multiply): stale garbage lanes may be NaN and NaN*0 == NaN.
        diff = jnp.where(valid_lane, diff, 0.0)
    stats_ref[0, v_total:v_total + 1, :] = jnp.sum(diff * diff).reshape(1, 1)


@functools.partial(jax.jit, static_argnames=("commitment_cost", "eps", "block_n",
                                              "v_chunk", "use_bf16"))
def vector_quantizer_forward(x, embedding, commitment_cost=0.25, eps=1e-10,
                             block_n=1024, v_chunk=512, use_bf16=True):
    """x: (B, C, N) float32, embedding: (V, H) float32 with H == C.

    Returns (loss, quantized (B, C, N) f32, perplexity), same forward semantics
    as the PyTorch VectorQuantizer. With use_bf16=True the MXU matmuls run in
    bf16 (f32 accumulation): near-tie argmin picks may differ and quantized
    codebook values are bf16-rounded; set use_bf16=False for exact f32 math.
    """
    b, c, n = x.shape
    v, h = embedding.shape
    assert c == h, "channel dim must equal embedding_dim"

    x32 = x.astype(jnp.float32)
    emb = embedding.astype(jnp.float32)
    half_esq = 0.5 * jnp.sum(emb * emb, axis=1, keepdims=True)       # (V, 1)

    # Lane tile: multiple of 128. No wrapper-side pad/slice; the ragged last
    # tile is masked in-kernel and its OOB writes are dropped by Pallas.
    tn = min(_round_up(block_n, 128), _round_up(n, 128))
    nt = pl.cdiv(n, tn)
    t_total = b * nt

    kernel = functools.partial(_vq_kernel, n_valid=n, block_n=tn, v_total=v,
                               v_chunk=min(v_chunk, v), use_bf16=use_bf16)

    q_out, stats = pl.pallas_call(
        kernel,
        out_shape=(
            jax.ShapeDtypeStruct((b, c, n), jnp.float32),
            jax.ShapeDtypeStruct((t_total, v + 1, 1), jnp.float32),
        ),
        grid_spec=pltpu.PrefetchScalarGridSpec(
            num_scalar_prefetch=0,
            grid=(b, nt),
            in_specs=[
                pl.BlockSpec((1, c, tn), lambda bi, ti: (bi, 0, ti)),
                # Constant index maps => nothing to pipeline: single-buffer the
                # resident codebook and half_esq to reclaim VMEM (matters for
                # large V on v7x's 64 MiB VMEM).
                pl.BlockSpec((v, h), lambda bi, ti: (0, 0),
                             pipeline_mode=pl.Buffered(1)),
                pl.BlockSpec((v, 1), lambda bi, ti: (0, 0),
                             pipeline_mode=pl.Buffered(1)),
            ],
            out_specs=(
                pl.BlockSpec((1, c, tn), lambda bi, ti: (bi, 0, ti)),
                pl.BlockSpec((1, v + 1, 1), lambda bi, ti: (bi * nt + ti, 0, 0)),
            ),
        ),
        compiler_params=pltpu.CompilerParams(
            # per-tile partial stats => whole grid is parallel (megacore on v7x)
            dimension_semantics=("parallel", "parallel"),
            vmem_limit_bytes=32 * 1024 * 1024,
        ),
    )(x32, emb, half_esq)
    # TODO(synk): for codebooks too big for VMEM, stream (V,H) chunks from HBM
    # via memory_space=pl.ANY + make_async_copy; optionally bf16 x/q I/O on
    # v6e/v7x to halve HBM traffic; a VPU-only path would suit tiny V,H.

    k = b * n
    # mse(quantized, inputs): e_latent_loss == q_latent_loss numerically in the
    # forward pass (detach only affects gradients).
    sse = jnp.sum(stats[:, v, 0])
    mse = sse / (k * h)
    loss = mse + commitment_cost * mse

    counts = jnp.sum(stats[:, :v, 0], axis=0)                        # (V,)
    avg_probs = counts / k
    perplexity = jnp.exp(-jnp.sum(avg_probs * jnp.log(avg_probs + eps)))
    return loss, q_out, perplexity


# TODO(synk): the reference's `torch.einsum('hv,vh->vh', ...)` / `'b n c -> k h'`
# rearranges are ill-typed as written; this implements the standard (intended)
# VQ-VAE forward.  Backward (straight-through estimator) is out of scope.


def _reference_jax(x, embedding, commitment_cost, eps):
    b, c, n = x.shape
    v, h = embedding.shape
    flat = jnp.transpose(x, (0, 2, 1)).reshape(b * n, h)
    d = (jnp.sum(flat ** 2, axis=1, keepdims=True)
         + jnp.sum(embedding ** 2, axis=1)
         - 2.0 * flat @ embedding.T)
    idx = jnp.argmin(d, axis=1)
    enc = jax.nn.one_hot(idx, v, dtype=jnp.float32)
    q = enc @ embedding
    mse = jnp.mean((q - flat) ** 2)
    loss = mse + commitment_cost * mse
    avg = jnp.mean(enc, axis=0)
    perp = jnp.exp(-jnp.sum(avg * jnp.log(avg + eps)))
    quant = jnp.transpose(q.reshape(b, n, c), (0, 2, 1))
    return loss, quant, perp


if __name__ == "__main__":
    num_embeddings = 8      # V
    embedding_dim = 32      # H (== channels C)
    commitment_cost = 0.25
    eps = 1e-10

    B, C, N = 2, embedding_dim, 16   # K = B*N = 32 positions (ragged tile path)

    key = jax.random.PRNGKey(0)
    k_emb, k_x = jax.random.split(key)
    # nn.Embedding weight init: uniform(-1/V, 1/V), shape (V, H)
    embedding = jax.random.uniform(
        k_emb, (num_embeddings, embedding_dim), jnp.float32,
        minval=-1.0 / num_embeddings, maxval=1.0 / num_embeddings)
    x = jax.random.normal(k_x, (B, C, N), jnp.float32) * 0.1

    # Fast path (bf16 MXU matmuls) — run once and make sure it executes.
    loss_bf16, q_bf16, perp_bf16 = vector_quantizer_forward(
        x, embedding, commitment_cost=commitment_cost, eps=eps, use_bf16=True)
    jax.block_until_ready((loss_bf16, q_bf16, perp_bf16))
    assert bool(jnp.isfinite(loss_bf16)) and bool(jnp.isfinite(perp_bf16))

    # Exact f32 path — check against a pure-JAX reference.
    loss, quantized, perplexity = vector_quantizer_forward(
        x, embedding, commitment_cost=commitment_cost, eps=eps, use_bf16=False)
    jax.block_until_ready((loss, quantized, perplexity))

    ref_loss, ref_q, ref_p = _reference_jax(x, embedding, commitment_cost, eps)
    assert jnp.allclose(loss, ref_loss, atol=1e-5), (loss, ref_loss)
    assert jnp.allclose(quantized, ref_q, atol=1e-5)
    assert jnp.allclose(perplexity, ref_p, atol=1e-5), (perplexity, ref_p)

    print("KERNEL_OK")
</pallas_src>

<mosaic_0001>
module attributes {stable_mosaic.version = 11 : i64} {
  func.func @_vq_kernel(%arg0: i32, %arg1: i32, %arg2: memref<1x32x128xf32, #tpu.memory_space<vmem>>, %arg3: memref<8x32xf32, #tpu.memory_space<vmem>>, %arg4: memref<8x1xf32, #tpu.memory_space<vmem>>, %arg5: memref<1x32x128xf32, #tpu.memory_space<vmem>>, %arg6: memref<1x9x1xf32, #tpu.memory_space<vmem>>) attributes {dimension_semantics = [#tpu.dimension_semantics<parallel>, #tpu.dimension_semantics<parallel>], iteration_bounds = array<i64: 2, 1>, scalar_prefetch = 0 : i64, scratch_operands = 0 : i64, tpu.core_type = #tpu.core_type<tc>, window_params = [{transform_indices = @transform_0, window_bounds = array<i64: 1, 32, 128>}, {pipeline_mode = #tpu.pipeline_mode<synchronous>, transform_indices = @transform_1, window_bounds = array<i64: 8, 32>}, {pipeline_mode = #tpu.pipeline_mode<synchronous>, transform_indices = @transform_2, window_bounds = array<i64: 8, 1>}, {transform_indices = @transform_3, window_bounds = array<i64: 1, 32, 128>}, {transform_indices = @transform_4, window_bounds = array<i64: 1, 9, 1>}]} {
    %c0 = arith.constant 0 : index
    %c0_0 = arith.constant 0 : index
    %c0_1 = arith.constant 0 : index
    %0 = vector.load %arg2[%c0, %c0_0, %c0_1] : memref<1x32x128xf32, #tpu.memory_space<vmem>>, vector<1x32x128xf32>
    %1 = vector.shape_cast %0 : vector<1x32x128xf32> to vector<32x128xf32>
    %2 = arith.truncf %1 : vector<32x128xf32> to vector<32x128xbf16>
    %cst = arith.constant 0x7F800000 : f32
    %3 = vector.broadcast %cst : f32 to vector<1x128xf32>
    %c8_i32 = arith.constant 8 : i32
    %4 = vector.broadcast %c8_i32 : i32 to vector<1x128xi32>
    %c0_2 = arith.constant 0 : index
    %c0_3 = arith.constant 0 : index
    %5 = vector.load %arg3[%c0_2, %c0_3] : memref<8x32xf32, #tpu.memory_space<vmem>>, vector<8x32xf32>
    %6 = arith.truncf %5 : vector<8x32xf32> to vector<8x32xbf16>
    %cst_4 = arith.constant dense<0.000000e+00> : vector<8x128xf32>
    %7 = tpu.matmul %6, %2, %cst_4 {dimension_numbers = #tpu.dot_dimension_numbers<[1], [0], [0], [1], [0, 0, 1, 1], [], []>} : vector<8x32xbf16>, vector<32x128xbf16>, vector<8x128xf32> -> vector<8x128xf32>
    %c0_5 = arith.constant 0 : index
    %c0_6 = arith.constant 0 : index
    %8 = vector.load %arg4[%c0_5, %c0_6] : memref<8x1xf32, #tpu.memory_space<vmem>>, vector<8x1xf32>
    %9 = vector.broadcast %8 : vector<8x1xf32> to vector<8x128xf32>
    %10 = arith.subf %9, %7 : vector<8x128xf32>
    %11 = tpu.iota {dimensions = array<i32: 0>} : vector<8x128xi32>
    %c0_i32 = arith.constant 0 : i32
    %12 = vector.broadcast %c0_i32 : i32 to vector<8x128xi32>
    %13 = arith.addi %11, %12 : vector<8x128xi32>
    %cst_7 = arith.constant dense<0x7F800000> : vector<128xf32>
    %14 = vector.multi_reduction <minimumf>, %10, %cst_7 [0] : vector<8x128xf32> to vector<128xf32>
    %15 = vector.shape_cast %14 : vector<128xf32> to vector<1x128xf32>
    %16 = vector.broadcast %15 : vector<1x128xf32> to vector<8x128xf32>
    %17 = arith.cmpf oeq, %10, %16 : vector<8x128xf32>
    %c8_i32_8 = arith.constant 8 : i32
    %18 = vector.broadcast %c8_i32_8 : i32 to vector<8x128xi32>
    %19 = arith.select %17, %13, %18 : vector<8x128xi1>, vector<8x128xi32>
    %cst_9 = arith.constant dense<2147483647> : vector<128xi32>
    %20 = vector.multi_reduction <minsi>, %19, %cst_9 [0] : vector<8x128xi32> to vector<128xi32>
    %21 = vector.shape_cast %20 : vector<128xi32> to vector<1x128xi32>
    %22 = arith.cmpf olt, %15, %3 : vector<1x128xf32>
    %23 = arith.select %22, %21, %4 : vector<1x128xi1>, vector<1x128xi32>
    %c128_i32 = arith.constant 128 : i32
    %24 = arith.muli %arg1, %c128_i32 : i32
    %25 = tpu.iota {dimensions = array<i32: 1>} : vector<1x128xi32>
    %26 = vector.broadcast %24 : i32 to vector<1x128xi32>
    %27 = arith.addi %25, %26 : vector<1x128xi32>
    %c16_i32 = arith.constant 16 : i32
    %28 = vector.broadcast %c16_i32 : i32 to vector<1x128xi32>
    %29 = arith.cmpi slt, %27, %28 : vector<1x128xi32>
    %30 = tpu.iota {dimensions = array<i32: 0>} : vector<128x1xi32>
    %31 = vector.broadcast %24 : i32 to vector<128x1xi32>
    %32 = arith.addi %30, %31 : vector<128x1xi32>
    %c16_i32_10 = arith.constant 16 : i32
    %33 = vector.broadcast %c16_i32_10 : i32 to vector<128x1xi32>
    %34 = arith.cmpi slt, %32, %33 : vector<128x1xi32>
    %35 = arith.extui %34 : vector<128x1xi1> to vector<128x1xi32>
    %36 = arith.sitofp %35 : vector<128x1xi32> to vector<128x1xf32>
    %cst_11 = arith.constant 0.000000e+00 : f32
    %37 = vector.broadcast %cst_11 : f32 to vector<32x128xf32>
    %c0_12 = arith.constant 0 : index
    %c0_13 = arith.constant 0 : index
    %38 = vector.load %arg3[%c0_12, %c0_13] : memref<8x32xf32, #tpu.memory_space<vmem>>, vector<8x32xf32>
    %39 = tpu.iota {dimensions = array<i32: 0>} : vector<8x128xi32>
    %c0_i32_14 = arith.constant 0 : i32
    %40 = vector.broadcast %c0_i32_14 : i32 to vector<8x128xi32>
    %41 = arith.addi %39, %40 : vector<8x128xi32>
    %42 = vector.broadcast %23 : vector<1x128xi32> to vector<8x128xi32>
    %43 = arith.cmpi eq, %41, %42 : vector<8x128xi32>
    %44 = arith.extui %43 : vector<8x128xi1> to vector<8x128xi32>
    %45 = arith.sitofp %44 : vector<8x128xi32> to vector<8x128xf32>
    %46 = arith.truncf %38 : vector<8x32xf32> to vector<8x32xbf16>
    %47 = arith.truncf %45 : vector<8x128xf32> to vector<8x128xbf16>
    %cst_15 = arith.constant dense<0.000000e+00> : vector<32x128xf32>
    %48 = tpu.matmul %46, %47, %cst_15 {dimension_numbers = #tpu.dot_dimension_numbers<[0], [0], [1], [1], [0, 1, 1, 1], [], []>} : vector<8x32xbf16>, vector<8x128xbf16>, vector<32x128xf32> -> vector<32x128xf32>
    %49 = arith.addf %37, %48 : vector<32x128xf32>
    %cst_16 = arith.constant dense<0.000000e+00> : vector<8x1xf32>
    %50 = tpu.matmul %45, %36, %cst_16 {dimension_numbers = #tpu.dot_dimension_numbers<[1], [0], [0], [1], [0, 0, 1, 1], [], []>} : vector<8x128xf32>, vector<128x1xf32>, vector<8x1xf32> -> vector<8x1xf32>
    %c0_17 = arith.constant 0 : index
    %c0_18 = arith.constant 0 : index
    %c0_19 = arith.constant 0 : index
    %51 = vector.load %arg6[%c0_17, %c0_18, %c0_19] : memref<1x9x1xf32, #tpu.memory_space<vmem>>, vector<1x8x1xf32>
    %52 = vector.shape_cast %51 : vector<1x8x1xf32> to vector<8x1xf32>
    %53 = vector.shape_cast %50 : vector<8x1xf32> to vector<1x8x1xf32>
    tpu.vector_store %arg6[%c0_17, %c0_18, %c0_19], %53 {strides = array<i32>} : memref<1x9x1xf32, #tpu.memory_space<vmem>>, vector<1x8x1xf32>,
    %54 = vector.shape_cast %49 : vector<32x128xf32> to vector<1x32x128xf32>
    %c0_20 = arith.constant 0 : index
    %c0_21 = arith.constant 0 : index
    %c0_22 = arith.constant 0 : index
    %55 = vector.load %arg5[%c0_20, %c0_21, %c0_22] : memref<1x32x128xf32, #tpu.memory_space<vmem>>, vector<1x32x128xf32>
    tpu.vector_store %arg5[%c0_20, %c0_21, %c0_22], %54 {strides = array<i32>} : memref<1x32x128xf32, #tpu.memory_space<vmem>>, vector<1x32x128xf32>,
    %56 = arith.subf %49, %1 : vector<32x128xf32>
    %cst_23 = arith.constant 0.000000e+00 : f32
    %57 = vector.shape_cast %29 : vector<1x128xi1> to vector<1x128xi1>
    %58 = vector.broadcast %57 : vector<1x128xi1> to vector<32x128xi1>
    %59 = vector.broadcast %cst_23 : f32 to vector<32x128xf32>
    %60 = arith.select %58, %56, %59 : vector<32x128xi1>, vector<32x128xf32>
    %61 = arith.mulf %60, %60 : vector<32x128xf32>
    %62 = vector.shape_cast %61 : vector<32x128xf32> to vector<1x32x128xf32>
    %cst_24 = arith.constant dense<0.000000e+00> : vector<1xf32>
    %63 = vector.multi_reduction <add>, %62, %cst_24 [1, 2] : vector<1x32x128xf32> to vector<1xf32>
    %64 = vector.shape_cast %63 : vector<1xf32> to vector<1x1x1xf32>
    %65 = vector.extract %64[0, 0, 0] : f32 from vector<1x1x1xf32>
    %66 = vector.broadcast %65 : f32 to vector<1x1xf32>
    %c0_25 = arith.constant 0 : index
    %c8 = arith.constant 8 : index
    %c0_26 = arith.constant 0 : index
    %67 = vector.load %arg6[%c0_25, %c8, %c0_26] : memref<1x9x1xf32, #tpu.memory_space<vmem>>, vector<1x1x1xf32>
    %68 = vector.shape_cast %67 : vector<1x1x1xf32> to vector<1x1xf32>
    %69 = vector.shape_cast %66 : vector<1x1xf32> to vector<1x1x1xf32>
    tpu.vector_store %arg6[%c0_25, %c8, %c0_26], %69 {strides = array<i32>} : memref<1x9x1xf32, #tpu.memory_space<vmem>>, vector<1x1x1xf32>,
    return
  }
  func.func @transform_0(%arg0: i32, %arg1: i32) -> (i32, i32, i32) {
    %c0_i32 = arith.constant 0 : i32
    %c0_i32_0 = arith.constant 0 : i32
    return %arg0, %c0_i32, %arg1 : i32, i32, i32
  }
  func.func @transform_1(%arg0: i32, %arg1: i32) -> (i32, i32) {
    %c0_i32 = arith.constant 0 : i32
    %c0_i32_0 = arith.constant 0 : i32
    %c0_i32_1 = arith.constant 0 : i32
    return %c0_i32, %c0_i32_0 : i32, i32
  }
  func.func @transform_2(%arg0: i32, %arg1: i32) -> (i32, i32) {
    %c0_i32 = arith.constant 0 : i32
    %c0_i32_0 = arith.constant 0 : i32
    %c0_i32_1 = arith.constant 0 : i32
    return %c0_i32, %c0_i32_0 : i32, i32
  }
  func.func @transform_3(%arg0: i32, %arg1: i32) -> (i32, i32, i32) {
    %c0_i32 = arith.constant 0 : i32
    %c0_i32_0 = arith.constant 0 : i32
    return %arg0, %c0_i32, %arg1 : i32, i32, i32
  }
  func.func @transform_4(%arg0: i32, %arg1: i32) -> (i32, i32, i32) {
    %c1_i32 = arith.constant 1 : i32
    %0 = arith.muli %arg0, %c1_i32 : i32
    %1 = arith.addi %0, %arg1 : i32
    %c0_i32 = arith.constant 0 : i32
    %c0_i32_0 = arith.constant 0 : i32
    %c0_i32_1 = arith.constant 0 : i32
    return %1, %c0_i32, %c0_i32_0 : i32, i32, i32
  }
}

</mosaic_0001>

<llo_original>
// kernel: vector_quantizer_forward.1
$region0: #{vector_quantizer_forward.1}
  #allocation0 [shape = 'u32[]', space=smem, size = 0x4, offset = 0x4, fixed_abs, tag = 'smem constant byte address 0x4 - core index']
  #allocation1 [shape = 'u32[144,128]{1,0:T(1,128)}', space=vmem, size = 0x12000, scoped, tag = 'internal scratch']
  %s0 = inlined_call_operand.vmem [shape: f32[2,32,16], index: 0, kind: input, shape index: {}]
  %s1 = inlined_call_operand.vmem [shape: f32[8,32], index: 1, kind: input, shape index: {}]
  %s2 = inlined_call_operand.vmem [shape: f32[8,1], index: 2, kind: input, shape index: {}]
  %s3 = inlined_call_operand.vmem [shape: f32[2,32,16], index: 3, kind: output, shape index: {0}]
  %s4 = inlined_call_operand.vmem [shape: f32[2,9,1], index: 4, kind: output, shape index: {1}]
  %5 = xla_tuple %s3, %s4
  %s6 = sld [smem:[#allocation0]]
  $region53: #{vector_quantizer_forward.1} parent=0
    _
  %s8 = ssub.s32 1, %s6
  %s9 = scalar_select 0, %s8, %s6
  loop: start=0, step=1, limit=4
  $region2: #{vector_quantizer_forward.1} parent=0 // loop_pre_header
    _
  $region3: #{vector_quantizer_forward.1} parent=0 // loop_header
    %s11 = sphi 0, %s15
    %p12 = scmp.ge.s32.totalorder %s11, 4
    %s18 = sphi 0, %s30
    %s19 = sphi 0, %s26
    %s20 = sphi 0, %s18
    %s21 = sphi 0, %s19
    %s22 = sphi 0, %s20
    %s23 = sphi 0, %s21
    %s35 = sphi 0, %s37
    %s38 = sphi 0, %s35
    %s39 = sphi 0, %s38
    %s55 = sphi 0, %s39
    %s59 = sphi 0, %s59
    %s61 = sphi 0, %s59
    %s62 = sphi 0, %s61
    %s76 = sphi 0, %s62
    %s80 = sphi 0, %s80
    %s82 = sphi 0, %s80
    %s83 = sphi 0, %s82
    %s97 = sphi 0, %s83
    %s105 = sphi 0, %s107
    %s108 = sphi 0, %s105
    %s109 = sphi 0, %s108
    %s125 = sphi 0, %s109
    %s133 = sphi 0, %s135
    %s136 = sphi 0, %s133
    %s137 = sphi 0, %s136
    %s153 = sphi 0, %s137
  $region4: #{vector_quantizer_forward.1} parent=0 // loop_header_branch
    %14 = sbr.rel (%p12) target = $region8
  $region5: #{vector_quantizer_forward.1} parent=0 // loop_body
    %s16 = ssub.s32 %s11, 1
    %s17 = ssub.s32 %s11, 2
    %s24 = sadd.s32 1, %s19
    %p25 = scmp.ge.s32.totalorder %s24, 1
    %s26 = scalar_select %p25, 0, %s24
    %s27 = sadd.s32 1, %s18
    %s28 = scalar_select %p25, %s27, %s18
    %p29 = scmp.ge.s32.totalorder %s28, 2
    %s30 = scalar_select %p29, 0, %s28
    %s31 = ssub.s32 %s18, %s30
    %s32 = ssub.s32 %s19, %s26
    %s33 = sor.u32 %s31, %s32
    %p34 = scmp.eq.s32.totalorder %s33, 0
    %s36 = sadd.s32 %s35, 1
    %s37 = scalar_select %p34, %s35, %s36
    %p40 = pneg %p34
    %p41 = scmp.eq.s32.totalorder %s11, 1
    %p42 = por %p40, %p41
    %p43 = scmp.ne.s32.totalorder %s35, %s38
    %p44 = scmp.eq.s32.totalorder %s11, 0
    %p45 = por %p43, %p44
    %p46 = scmp.ne.s32.totalorder %s35, %s38
    %p47 = scmp.eq.s32.totalorder %s16, 1
    %p48 = por %p46, %p47
    %p49 = scmp.ne.s32.totalorder %s38, %s39
    %p50 = scmp.eq.s32.totalorder %s16, 0
    %p51 = por %p49, %p50
    %p52 = scmp.ne.s32.totalorder %s38, %s39
    %p53 = scmp.eq.s32.totalorder %s17, 1
    %p54 = por %p52, %p53
    %p56 = scmp.ne.s32.totalorder %s39, %s55
    %p57 = scmp.eq.s32.totalorder %s17, 0
    %p58 = por %p56, %p57
    %s60 = sadd.s32 %s59, 1
    %p63 = scmp.eq.s32.totalorder %s11, 1
    %p64 = scmp.ne.s32.totalorder %s59, %s61
    %p65 = scmp.eq.s32.totalorder %s11, 0
    %p66 = por %p64, %p65
    %p67 = scmp.ne.s32.totalorder %s59, %s61
    %p68 = scmp.eq.s32.totalorder %s16, 1
    %p69 = por %p67, %p68
    %p70 = scmp.ne.s32.totalorder %s61, %s62
    %p71 = scmp.eq.s32.totalorder %s16, 0
    %p72 = por %p70, %p71
    %p73 = scmp.ne.s32.totalorder %s61, %s62
    %p74 = scmp.eq.s32.totalorder %s17, 1
    %p75 = por %p73, %p74
    %p77 = scmp.ne.s32.totalorder %s62, %s76
    %p78 = scmp.eq.s32.totalorder %s17, 0
    %p79 = por %p77, %p78
    %s81 = sadd.s32 %s80, 1
    %p84 = scmp.eq.s32.totalorder %s11, 1
    %p85 = scmp.ne.s32.totalorder %s80, %s82
    %p86 = scmp.eq.s32.totalorder %s11, 0
    %p87 = por %p85, %p86
    %p88 = scmp.ne.s32.totalorder %s80, %s82
    %p89 = scmp.eq.s32.totalorder %s16, 1
    %p90 = por %p88, %p89
    %p91 = scmp.ne.s32.totalorder %s82, %s83
    %p92 = scmp.eq.s32.totalorder %s16, 0
    %p93 = por %p91, %p92
    %p94 = scmp.ne.s32.totalorder %s82, %s83
    %p95 = scmp.eq.s32.totalorder %s17, 1
    %p96 = por %p94, %p95
    %p98 = scmp.ne.s32.totalorder %s83, %s97
    %p99 = scmp.eq.s32.totalorder %s17, 0
    %p100 = por %p98, %p99
    %s101 = ssub.s32 %s18, %s30
    %s102 = ssub.s32 %s19, %s26
    %s103 = sor.u32 %s101, %s102
    %p104 = scmp.eq.s32.totalorder %s103, 0
    %s106 = sadd.s32 %s105, 1
    %s107 = scalar_select %p104, %s105, %s106
    %p110 = pneg %p104
    %p111 = scmp.eq.s32.totalorder %s11, 1
    %p112 = por %p110, %p111
    %p113 = scmp.ne.s32.totalorder %s105, %s108
    %p114 = scmp.eq.s32.totalorder %s11, 0
    %p115 = por %p113, %p114
    %p116 = scmp.ne.s32.totalorder %s105, %s108
    %p117 = scmp.eq.s32.totalorder %s16, 1
    %p118 = por %p116, %p117
    %p119 = scmp.ne.s32.totalorder %s108, %s109
    %p120 = scmp.eq.s32.totalorder %s16, 0
    %p121 = por %p119, %p120
    %p122 = scmp.ne.s32.totalorder %s108, %s109
    %p123 = scmp.eq.s32.totalorder %s17, 1
    %p124 = por %p122, %p123
    %p126 = scmp.ne.s32.totalorder %s109, %s125
    %p127 = scmp.eq.s32.totalorder %s17, 0
    %p128 = por %p126, %p127
    %s129 = sadd.s32 %s18, %s19
    %s130 = sadd.s32 %s30, %s26
    %s131 = ssub.s32 %s129, %s130
    %p132 = scmp.eq.s32.totalorder %s131, 0
    %s134 = sadd.s32 %s133, 1
    %s135 = scalar_select %p132, %s133, %s134
    %p138 = pneg %p132
    %p139 = scmp.eq.s32.totalorder %s11, 1
    %p140 = por %p138, %p139
    %p141 = scmp.ne.s32.totalorder %s133, %s136
    %p142 = scmp.eq.s32.totalorder %s11, 0
    %p143 = por %p141, %p142
    %p144 = scmp.ne.s32.totalorder %s133, %s136
    %p145 = scmp.eq.s32.totalorder %s16, 1
    %p146 = por %p144, %p145
    %p147 = scmp.ne.s32.totalorder %s136, %s137
    %p148 = scmp.eq.s32.totalorder %s16, 0
    %p149 = por %p147, %p148
    %p150 = scmp.ne.s32.totalorder %s136, %s137
    %p151 = scmp.eq.s32.totalorder %s17, 1
    %p152 = por %p150, %p151
    %p154 = scmp.ne.s32.totalorder %s137, %s153
    %p155 = scmp.eq.s32.totalorder %s17, 0
    %p156 = por %p154, %p155
    %p157 = scmp.le.s32.totalorder 1, %s11
    %p158 = scmp.lt.s32.totalorder %s11, 3
    %p159 = pnand %p157, %p158
    %p160 = pneg %p159
    // Predicated region
    $region9: #{vector_quantizer_forward.1} parent=5 // pred_check
      _
    $region10: #{vector_quantizer_forward.1} parent=5 // pred_check_branch
      %162 = sbr.rel (%p159) target = $region12
    $region11: #{vector_quantizer_forward.1} parent=5 // pred_region
      %s163 = ssub.s32 %s11, 1
      // Predicated region
      $region13: #{vector_quantizer_forward.1} parent=11 // pred_check
        %p164 = pneg %p72
      $region14: #{vector_quantizer_forward.1} parent=11 // pred_check_branch
        %166 = sbr.rel (%p164) target = $region16
      $region15: #{vector_quantizer_forward.1} parent=11 // pred_region
        _
      $region16: #{vector_quantizer_forward.1} parent=11 // pred_fallthru
        _
      // Predicated region
      $region17: #{vector_quantizer_forward.1} parent=11 // pred_check
        %p167 = pneg %p93
      $region18: #{vector_quantizer_forward.1} parent=11 // pred_check_branch
        %169 = sbr.rel (%p167) target = $region20
      $region19: #{vector_quantizer_forward.1} parent=11 // pred_region
        _
      $region20: #{vector_quantizer_forward.1} parent=11 // pred_fallthru
        _
    $region12: #{vector_quantizer_forward.1} parent=5 // pred_fallthru
      _
    %p170 = scmp.lt.s32.totalorder %s11, 2
    // Predicated region
    $region21: #{vector_quantizer_forward.1} parent=5 // pred_check
      %p171 = pneg %p170
    $region22: #{vector_quantizer_forward.1} parent=5 // pred_check_branch
      %173 = sbr.rel (%p171) target = $region24
    $region23: #{vector_quantizer_forward.1} parent=5 // pred_region
      // Predicated region
      $region25: #{vector_quantizer_forward.1} parent=23 // pred_check
        %p174 = pneg %p45
      $region26: #{vector_quantizer_forward.1} parent=23 // pred_check_branch
        %176 = sbr.rel (%p174) target = $region28
      $region27: #{vector_quantizer_forward.1} parent=23 // pred_region
        %p177 = scmp.lt.s32.totalorder %s18, 1
        %s178 = scalar_select %p177, %s18, 1
        %p179 = scmp.lt.s32.totalorder %s19, 0
        %s180 = scalar_select %p179, %s19, 0
        %s181 = smul.addr %s178, 4
        %s182 = sadd.s32 %s180, %s181
        %s183 = smul.addr %s182, 8
        %s184 = scalar_lea.vmem %s0, %s183
      $region28: #{vector_quantizer_forward.1} parent=23 // pred_fallthru
        _
    $region24: #{vector_quantizer_forward.1} parent=5 // pred_fallthru
      _
    %p185 = scmp.le.s32.totalorder 1, %s11
    %p186 = scmp.lt.s32.totalorder %s11, 3
    %p187 = pnand %p185, %p186
    %p188 = pneg %p187
    // Predicated region
    $region29: #{vector_quantizer_forward.1} parent=5 // pred_check
      _
    $region30: #{vector_quantizer_forward.1} parent=5 // pred_check_branch
      %190 = sbr.rel (%p187) target = $region32
    $region31: #{vector_quantizer_forward.1} parent=5 // pred_region
      %s191 = ssub.s32 %s11, 1
      %p192 = scmp.lt.s32.totalorder %s20, 1
      %s193 = scalar_select %p192, %s20, 1
      %p194 = scmp.lt.s32.totalorder %s21, 0
      %s195 = scalar_select %p194, %s21, 0
      %s196 = smul.addr %s193, 4
      %s197 = sadd.s32 %s195, %s196
      %s198 = smul.addr %s197, 8
      %s199 = scalar_lea.vmem %s0, %s198
      %p200 = pneg %p51
      %p201 = pneg %p48
      %p202 = pneg %p72
      %p203 = pneg %p69
      %p204 = pneg %p93
      %p205 = pneg %p90
      %p206 = pneg %p121
      %p207 = pneg %p118
      %p208 = scmp.lt.s32.totalorder %s20, 1
      %s209 = scalar_select %p208, %s20, 1
      %p210 = scmp.lt.s32.totalorder %s21, 0
      %s211 = scalar_select %p210, %s21, 0
      %s212 = smul.addr %s209, 4
      %s213 = sadd.s32 %s211, %s212
      %s214 = smul.addr %s213, 8
      %s215 = scalar_lea.vmem %s3, %s214
      %p216 = pneg %p149
      %p217 = pneg %p146
      %s218 = sadd.s32 %s20, %s21
      %p219 = scmp.lt.s32.totalorder %s218, 1
      %s220 = scalar_select %p219, %s218, 1
      %s221 = smul.addr %s220, 2
      %s222 = smul.addr %s221, 8
      %s223 = scalar_lea.vmem %s4, %s222
      %p224 = scmp.lt.s32.totalorder %s20, 1
      %s225 = scalar_select %p224, %s20, 1
      %p226 = scmp.lt.s32.totalorder %s21, 0
      %s227 = scalar_select %p226, %s21, 0
      %s228 = smul.addr %s225, 4
      %s229 = sadd.s32 %s227, %s228
      %s230 = smul.addr %s229, 8
      %s231 = scalar_lea.vmem %s0, %s230
      %p232 = scmp.lt.s32.totalorder %s20, 1
      %s233 = scalar_select %p232, %s20, 1
      %p234 = scmp.lt.s32.totalorder %s21, 0
      %s235 = scalar_select %p234, %s21, 0
      %s236 = smul.addr %s233, 4
      %s237 = sadd.s32 %s235, %s236
      %s238 = smul.addr %s237, 8
      %s239 = scalar_lea.vmem %s3, %s238
      %s240 = sadd.s32 %s20, %s21
      %p241 = scmp.lt.s32.totalorder %s240, 1
      %s242 = scalar_select %p241, %s240, 1
      %s243 = smul.addr %s242, 2
      %s244 = smul.addr %s243, 8
      %s245 = scalar_lea.vmem %s4, %s244
      %s246 = sadd.s32 %s20, %s21
      %v248 = vld [vmem:[%s231] sm:$0xff]
      %v249 = vld [vmem:[%s231 + $0x8] sm:$0xff]
      %v250 = vld [vmem:[%s231 + $0x10] sm:$0xff]
      %v251 = vld [vmem:[%s231 + $0x18] sm:$0xff]
      %v252 = vpack.c.bf16 %v249, %v248
      %v253 = vpack.c.bf16 %v251, %v250
      %v254 = vld [vmem:[%s1] sm:$0xff]
      %v255 = vpack.c.bf16 %v254, %v254
      %vm256 = vcmask 261120
      %v258 = vsel %vm256, %v255, 0
      %260 = vmatprep.subr.bf16.mxu0 0
      %261 = vmatpush1.bf16.msra.mxu0 0
      %262 = vmatprep.subr.bf16.mxu0 0
      %263 = vmatpush1.bf16.msra.mxu0 0
      %264 = vmatprep.subr.bf16.mxu0 0
      %265 = vmatpush1.bf16.msra.mxu0 0
      %266 = vmatprep.subr.bf16.mxu0 0
      %267 = vmatpush1.bf16.msra.mxu0 0
      %268 = vmatprep.subr.bf16.mxu0 0
      %269 = vmatpush1.bf16.msra.mxu0 0
      %270 = vmatprep.subr.bf16.mxu0 0
      %271 = vmatpush1.bf16.msra.mxu0 0
      %272 = vmatprep.subr.bf16.mxu0 0
      %273 = vmatpush1.bf16.msra.mxu0 %v253
      %274 = vmatprep.subr.bf16.mxu0 0
      %275 = vmatpush1.bf16.msra.mxu0 %v252
      %276 = vmatprep.subr.bf16.mxu0 0
      %277 = vmatpush2.bf16.msra.mxu0 0
      %278 = vmatprep.subr.bf16.mxu0 0
      %279 = vmatpush2.bf16.msra.mxu0 0
      %280 = vmatprep.subr.bf16.mxu0 0
      %281 = vmatpush2.bf16.msra.mxu0 0
      %282 = vmatprep.subr.bf16.mxu0 0
      %283 = vmatpush2.bf16.msra.mxu0 0
      %284 = vmatprep.subr.bf16.mxu0 0
      %285 = vmatpush2.bf16.msra.mxu0 0
      %286 = vmatprep.subr.bf16.mxu0 0
      %287 = vmatpush2.bf16.msra.mxu0 0
      %288 = vmatprep.subr.bf16.mxu0 0
      %289 = vmatpush2.bf16.msra.mxu0 0
      %290 = vmatprep.subr.bf16.mxu0 0
      %291 = vmatpush2.bf16.msra.mxu0 0
      %292 = vmatprep.mubr.bf16.mxu0 0
      %293 = vmatmul.mubr.bf16.gmra.mxu0 %v258
      %v294 = vpop.f32.mrf.mxu0
      %v295 = vadd.f32 0.0, %v294
      %v296 = vpop.f32.mrf.mxu0
      %v297 = vpop.f32.mrf.mxu0
      %v298 = vpop.f32.mrf.mxu0
      %299 = vdwg.mxu0
      %v300 = vld [vmem:[%s2] sm:$0xff]
      %302 = vset.pattern.permute.xlu0 0
      %303 = vperm.xlu0 %302, %v300
      %v304 = vpop.permute.xlu0 %303
      %v306 = vsub.f32 %v304, %v295
      %v307 = vlaneseq
      %v308 = vshrl.u32 %v307, 7
      %v309 = vrot.slane %v306, 4
      %v310 = vmin.f32 %v306, %v309
      %v311 = vrot.slane %v310, 2
      %v312 = vmin.f32 %v310, %v311
      %v313 = vrot.slane %v312, 1
      %v314 = vmin.f32 %v312, %v313
      %vm315 = vcmp.eq.f32.partialorder %v306, %v314
      %v316 = vsel %vm315, %v308, 8
      %v317 = vrot.slane %v316, 4
      %vm318 = vcmp.lt.s32.totalorder %v316, %v317
      %v319 = vsel %vm318, %v316, %v317
      %v320 = vrot.slane %v319, 2
      %vm321 = vcmp.lt.s32.totalorder %v319, %v320
      %v322 = vsel %vm321, %v319, %v320
      %v323 = vrot.slane %v322, 1
      %vm324 = vcmp.lt.s32.totalorder %v322, %v323
      %v325 = vsel %vm324, %v322, %v323
      %vm326 = vcmp.lt.f32.partialorder %v314, inf
      %v327 = vsel %vm326, %v325, 8
      %s328 = smul.u32 %s21, 128
      %v329 = vlaneseq
      %v330 = vand.u32 %v329, 127
      %v331 = vstv %s328
      %v332 = vadd.s32 %v330, %v331
      %vm333 = vcmp.lt.s32.totalorder %v332, 16
      %v334 = vadd.s32 %v308, 8
      %v335 = vadd.s32 %v308, 16
      %v336 = vadd.s32 %v308, 24
      %v337 = vadd.s32 %v308, 32
      %v338 = vadd.s32 %v308, 40
      %v339 = vadd.s32 %v308, 48
      %v340 = vadd.s32 %v308, 56
      %v341 = vadd.s32 %v308, 64
      %v342 = vadd.s32 %v308, 72
      %v343 = vadd.s32 %v308, 80
      %v344 = vadd.s32 %v308, 88
      %v345 = vadd.s32 %v308, 96
      %v346 = vadd.s32 %v308, 104
      %v347 = vadd.s32 %v308, 112
      %v348 = vadd.s32 %v308, 120
      %v349 = vadd.s32 %v308, %v331
      %v350 = vadd.s32 %v334, %v331
      %v351 = vadd.s32 %v335, %v331
      %v352 = vadd.s32 %v336, %v331
      %v353 = vadd.s32 %v337, %v331
      %v354 = vadd.s32 %v338, %v331
      %v355 = vadd.s32 %v339, %v331
      %v356 = vadd.s32 %v340, %v331
      %v357 = vadd.s32 %v341, %v331
      %v358 = vadd.s32 %v342, %v331
      %v359 = vadd.s32 %v343, %v331
      %v360 = vadd.s32 %v344, %v331
      %v361 = vadd.s32 %v345, %v331
      %v362 = vadd.s32 %v346, %v331
      %v363 = vadd.s32 %v347, %v331
      %v364 = vadd.s32 %v348, %v331
      %vm365 = vcmp.lt.s32.totalorder %v349, 16
      %vm366 = vcmp.lt.s32.totalorder %v350, 16
      %vm367 = vcmp.lt.s32.totalorder %v351, 16
      %vm368 = vcmp.lt.s32.totalorder %v352, 16
      %vm369 = vcmp.lt.s32.totalorder %v353, 16
      %vm370 = vcmp.lt.s32.totalorder %v354, 16
      %vm371 = vcmp.lt.s32.totalorder %v355, 16
      %vm372 = vcmp.lt.s32.totalorder %v356, 16
      %vm373 = vcmp.lt.s32.totalorder %v357, 16
      %vm374 = vcmp.lt.s32.totalorder %v358, 16
      %vm375 = vcmp.lt.s32.totalorder %v359, 16
      %vm376 = vcmp.lt.s32.totalorder %v360, 16
      %vm377 = vcmp.lt.s32.totalorder %v361, 16
      %vm378 = vcmp.lt.s32.totalorder %v362, 16
      %vm379 = vcmp.lt.s32.totalorder %v363, 16
      %vm380 = vcmp.lt.s32.totalorder %v364, 16
      %v381 = vsel %vm365, 1, 0
      %v382 = vsel %vm366, 1, 0
      %v383 = vsel %vm367, 1, 0
      %v384 = vsel %vm368, 1, 0
      %v385 = vsel %vm369, 1, 0
      %v386 = vsel %vm370, 1, 0
      %v387 = vsel %vm371, 1, 0
      %v388 = vsel %vm372, 1, 0
      %v389 = vsel %vm373, 1, 0
      %v390 = vsel %vm374, 1, 0
      %v391 = vsel %vm375, 1, 0
      %v392 = vsel %vm376, 1, 0
      %v393 = vsel %vm377, 1, 0
      %v394 = vsel %vm378, 1, 0
      %v395 = vsel %vm379, 1, 0
      %v396 = vsel %vm380, 1, 0
      %v397 = vcvt.s32.f32 %v381
      %v398 = vcvt.s32.f32 %v382
      %v399 = vcvt.s32.f32 %v383
      %v400 = vcvt.s32.f32 %v384
      %v401 = vcvt.s32.f32 %v385
      %v402 = vcvt.s32.f32 %v386
      %v403 = vcvt.s32.f32 %v387
      %v404 = vcvt.s32.f32 %v388
      %v405 = vcvt.s32.f32 %v389
      %v406 = vcvt.s32.f32 %v390
      %v407 = vcvt.s32.f32 %v391
      %v408 = vcvt.s32.f32 %v392
      %v409 = vcvt.s32.f32 %v393
      %v410 = vcvt.s32.f32 %v394
      %v411 = vcvt.s32.f32 %v395
      %v412 = vcvt.s32.f32 %v396
      %vm413 = vcmp.eq.s32.totalorder %v308, %v327
      %v414 = vsel %vm413, 1, 0
      %v415 = vcvt.s32.f32 %v414
      %v416 = vpack.c.bf16 %v415, %v415
      %417 = vxpose.xlu0.c.b16.start [1/8] %v255, 128
      %418 = vxpose.xlu0.c.b16.cont [2/8] 0, 128
      %419 = vxpose.xlu0.c.b16.cont [3/8] 0, 128
      %420 = vxpose.xlu0.c.b16.cont [4/8] 0, 128
      %421 = vxpose.xlu0.c.b16.cont [5/8] 0, 128
      %422 = vxpose.xlu0.c.b16.cont [6/8] 0, 128
      %423 = vxpose.xlu0.c.b16.cont [7/8] 0, 128
      %424 = vxpose.xlu0.c.b16.end [8/8] 0, 128
      %v425 = vpop.trf.xlu0
      %v426 = vpop.trf.xlu0
      %v427 = vpop.trf.xlu0
      %v428 = vpop.trf.xlu0
      %v429 = vpop.trf.xlu0
      %v430 = vpop.trf.xlu0
      %v431 = vpop.trf.xlu0
      %v432 = vpop.trf.xlu0
      %vm433 = vcmask 64512
      %v435 = vsel %vm433, %v425, 0
      %v438 = vsel %vm433, %v426, 0
      %vm440 = vcmask 1043456
      %v442 = vsel %vm440, %v416, 0
      %444 = vmatprep.subr.bf16.mxu0 0
      %445 = vmatpush1.bf16.msra.mxu0 0
      %446 = vmatprep.subr.bf16.mxu0 0
      %447 = vmatpush1.bf16.msra.mxu0 0
      %448 = vmatprep.subr.bf16.mxu0 0
      %449 = vmatpush1.bf16.msra.mxu0 0
      %450 = vmatprep.subr.bf16.mxu0 0
      %451 = vmatpush1.bf16.msra.mxu0 0
      %452 = vmatprep.subr.bf16.mxu0 0
      %453 = vmatpush1.bf16.msra.mxu0 0
      %454 = vmatprep.subr.bf16.mxu0 0
      %455 = vmatpush1.bf16.msra.mxu0 0
      %456 = vmatprep.subr.bf16.mxu0 0
      %457 = vmatpush1.bf16.msra.mxu0 0
      %458 = vmatprep.subr.bf16.mxu0 0
      %459 = vmatpush1.bf16.msra.mxu0 %v442
      %460 = vmatprep.subr.bf16.mxu0 0
      %461 = vmatpush2.bf16.msra.mxu0 0
      %462 = vmatprep.subr.bf16.mxu0 0
      %463 = vmatpush2.bf16.msra.mxu0 0
      %464 = vmatprep.subr.bf16.mxu0 0
      %465 = vmatpush2.bf16.msra.mxu0 0
      %466 = vmatprep.subr.bf16.mxu0 0
      %467 = vmatpush2.bf16.msra.mxu0 0
      %468 = vmatprep.subr.bf16.mxu0 0
      %469 = vmatpush2.bf16.msra.mxu0 0
      %470 = vmatprep.subr.bf16.mxu0 0
      %471 = vmatpush2.bf16.msra.mxu0 0
      %472 = vmatprep.subr.bf16.mxu0 0
      %473 = vmatpush2.bf16.msra.mxu0 0
      %474 = vmatprep.subr.bf16.mxu0 0
      %475 = vmatpush2.bf16.msra.mxu0 0
      %476 = vmatprep.mubr.bf16.mxu0 0
      %477 = vmatmul.mubr.bf16.gmra.mxu0 %v435
      %v478 = vpop.f32.mrf.mxu0
      %v479 = vadd.f32 0.0, %v478
      %v480 = vpop.f32.mrf.mxu0
      %v481 = vpop.f32.mrf.mxu0
      %v482 = vadd.f32 0.0, %v481
      %v483 = vpop.f32.mrf.mxu0
      %484 = vmatprep.mubr.bf16.mxu0 0
      %485 = vmatmul.mubr.bf16.gmra.mxu0 %v438
      %v486 = vpop.f32.mrf.mxu0
      %v487 = vadd.f32 0.0, %v486
      %v488 = vpop.f32.mrf.mxu0
      %v489 = vpop.f32.mrf.mxu0
      %v490 = vadd.f32 0.0, %v489
      %v491 = vpop.f32.mrf.mxu0
      %492 = vdwg.mxu0
      %493 = vmatprep.subr.mxu0 0.0
      %494 = vmatpush1.msra.mxu0 %v412
      %495 = vmatprep.subr.mxu0 0.0
      %496 = vmatpush1.msra.mxu0 %v411
      %497 = vmatprep.subr.mxu0 0.0
      %498 = vmatpush1.msra.mxu0 %v410
      %499 = vmatprep.subr.mxu0 0.0
      %500 = vmatpush1.msra.mxu0 %v409
      %501 = vmatprep.subr.mxu0 0.0
      %502 = vmatpush1.msra.mxu0 %v408
      %503 = vmatprep.subr.mxu0 0.0
      %504 = vmatpush1.msra.mxu0 %v407
      %505 = vmatprep.subr.mxu0 0.0
      %506 = vmatpush1.msra.mxu0 %v406
      %507 = vmatprep.subr.mxu0 0.0
      %508 = vmatpush1.msra.mxu0 %v405
      %509 = vmatprep.subr.mxu0 0.0
      %510 = vmatpush1.msra.mxu0 %v404
      %511 = vmatprep.subr.mxu0 0.0
      %512 = vmatpush1.msra.mxu0 %v403
      %513 = vmatprep.subr.mxu0 0.0
      %514 = vmatpush1.msra.mxu0 %v402
      %515 = vmatprep.subr.mxu0 0.0
      %516 = vmatpush1.msra.mxu0 %v401
      %517 = vmatprep.subr.mxu0 0.0
      %518 = vmatpush1.msra.mxu0 %v400
      %519 = vmatprep.subr.mxu0 0.0
      %520 = vmatpush1.msra.mxu0 %v399
      %521 = vmatprep.subr.mxu0 0.0
      %522 = vmatpush1.msra.mxu0 %v398
      %523 = vmatprep.subr.mxu0 0.0
      %524 = vmatpush1.msra.mxu0 %v397
      %525 = vmatprep.subr.mxu0 0.0
      %526 = vmatpush2.msra.mxu0 0.0
      %527 = vmatprep.subr.mxu0 0.0
      %528 = vmatpush2.msra.mxu0 0.0
      %529 = vmatprep.subr.mxu0 0.0
      %530 = vmatpush2.msra.mxu0 0.0
      %531 = vmatprep.subr.mxu0 0.0
      %532 = vmatpush2.msra.mxu0 0.0
      %533 = vmatprep.subr.mxu0 0.0
      %534 = vmatpush2.msra.mxu0 0.0
      %535 = vmatprep.subr.mxu0 0.0
      %536 = vmatpush2.msra.mxu0 0.0
      %537 = vmatprep.subr.mxu0 0.0
      %538 = vmatpush2.msra.mxu0 0.0
      %539 = vmatprep.subr.mxu0 0.0
      %540 = vmatpush2.msra.mxu0 0.0
      %541 = vmatprep.subr.mxu0 0.0
      %542 = vmatpush2.msra.mxu0 0.0
      %543 = vmatprep.subr.mxu0 0.0
      %544 = vmatpush2.msra.mxu0 0.0
      %545 = vmatprep.subr.mxu0 0.0
      %546 = vmatpush2.msra.mxu0 0.0
      %547 = vmatprep.subr.mxu0 0.0
      %548 = vmatpush2.msra.mxu0 0.0
      %549 = vmatprep.subr.mxu0 0.0
      %550 = vmatpush2.msra.mxu0 0.0
      %551 = vmatprep.subr.mxu0 0.0
      %552 = vmatpush2.msra.mxu0 0.0
      %553 = vmatprep.subr.mxu0 0.0
      %554 = vmatpush2.msra.mxu0 0.0
      %555 = vmatprep.subr.mxu0 0.0
      %556 = vmatpush2.msra.mxu0 0.0
      %557 = vmatprep.mubr.f32.mxu0 0.0
      %558 = vmatmul.mubr.f32.gmra.mxu0 %v415
      %v559 = vpop.f32.mrf.mxu0
      %v560 = vadd.f32 0.0, %v559
      %v561 = vpop.f32.mrf.mxu0
      %562 = vdwg.mxu0
      %vm563 = vcmask 7168
      %564 = vst.msk [vmem:[%s245] sm:$0xff] %vm563, %v560
      %565 = vst [vmem:[%s239] sm:$0xff] %v479
      %566 = vst [vmem:[%s239 + $0x8] sm:$0xff] %v482
      %567 = vst [vmem:[%s239 + $0x10] sm:$0xff] %v487
      %568 = vst [vmem:[%s239 + $0x18] sm:$0xff] %v490
      %v569 = vsub.f32 %v479, %v248
      %v570 = vsub.f32 %v482, %v249
      %v571 = vsub.f32 %v487, %v250
      %v572 = vsub.f32 %v490, %v251
      %v573 = vsel %vm333, 1, 0
      %vm574 = vcmp.eq.s32.totalorder %v573, 1
      %v575 = vsel %vm574, %v569, 0.0
      %v576 = vsel %vm574, %v570, 0.0
      %v577 = vsel %vm574, %v571, 0.0
      %v578 = vsel %vm574, %v572, 0.0
      %v579 = vmul.f32 %v575, %v575
      %v580 = vmul.f32 %v576, %v576
      %v581 = vmul.f32 %v577, %v577
      %v582 = vmul.f32 %v578, %v578
      %v583 = vadd.f32 %v579, %v580
      %v584 = vadd.f32 %v583, %v581
      %v585 = vadd.f32 %v584, %v582
      %586 = vadd.xlane.f32.xlu0 %v585
      %v587 = vpop.xlane.xlu0 %586
      %v588 = vrot.slane %v587, 4
      %v589 = vadd.f32 %v587, %v588
      %v590 = vrot.slane %v589, 2
      %v591 = vadd.f32 %v589, %v590
      %v592 = vrot.slane %v591, 1
      %v593 = vadd.f32 %v591, %v592
      %s594 = vtos %v593
      %v595 = vstv %s594
      %vm596 = vcmask 0
      %597 = vst.msk [vmem:[%s245 + $0x8] sm:$0x1] %vm596, %v595
      %p598 = scmp.lt.s32.totalorder %s20, 1
      %s599 = scalar_select %p598, %s20, 1
      %p600 = scmp.lt.s32.totalorder %s21, 0
      %s601 = scalar_select %p600, %s21, 0
      %s602 = smul.addr %s599, 4
      %s603 = sadd.s32 %s601, %s602
      %s604 = smul.addr %s603, 8
      %s605 = scalar_lea.vmem %s3, %s604
      %s606 = sadd.s32 %s20, %s21
      %p607 = scmp.lt.s32.totalorder %s606, 1
      %s608 = scalar_select %p607, %s606, 1
      %s609 = smul.addr %s608, 2
      %s610 = smul.addr %s609, 8
      %s611 = scalar_lea.vmem %s4, %s610
      // Predicated region
      $region33: #{vector_quantizer_forward.1} parent=31 // pred_check
        %p612 = pneg %p118
      $region34: #{vector_quantizer_forward.1} parent=31 // pred_check_branch
        %614 = sbr.rel (%p612) target = $region36
      $region35: #{vector_quantizer_forward.1} parent=31 // pred_region
        _
      $region36: #{vector_quantizer_forward.1} parent=31 // pred_fallthru
        _
      // Predicated region
      $region37: #{vector_quantizer_forward.1} parent=31 // pred_check
        %p615 = pneg %p146
      $region38: #{vector_quantizer_forward.1} parent=31 // pred_check_branch
        %617 = sbr.rel (%p615) target = $region40
      $region39: #{vector_quantizer_forward.1} parent=31 // pred_region
        %s618 = sadd.s32 %s20, %s21
      $region40: #{vector_quantizer_forward.1} parent=31 // pred_fallthru
        _
    $region32: #{vector_quantizer_forward.1} parent=5 // pred_fallthru
      _
    %p619 = scmp.le.s32.totalorder 2, %s11
    // Predicated region
    $region41: #{vector_quantizer_forward.1} parent=5 // pred_check
      %p620 = pneg %p619
    $region42: #{vector_quantizer_forward.1} parent=5 // pred_check_branch
      %622 = sbr.rel (%p620) target = $region44
    $region43: #{vector_quantizer_forward.1} parent=5 // pred_region
      %s623 = ssub.s32 %s11, 2
      // Predicated region
      $region45: #{vector_quantizer_forward.1} parent=43 // pred_check
        %p624 = pneg %p124
      $region46: #{vector_quantizer_forward.1} parent=43 // pred_check_branch
        %626 = sbr.rel (%p624) target = $region48
      $region47: #{vector_quantizer_forward.1} parent=43 // pred_region
        %p627 = scmp.lt.s32.totalorder %s22, 1
        %s628 = scalar_select %p627, %s22, 1
        %p629 = scmp.lt.s32.totalorder %s23, 0
        %s630 = scalar_select %p629, %s23, 0
        %s631 = smul.addr %s628, 4
        %s632 = sadd.s32 %s630, %s631
        %s633 = smul.addr %s632, 8
        %s634 = scalar_lea.vmem %s3, %s633
      $region48: #{vector_quantizer_forward.1} parent=43 // pred_fallthru
        _
      // Predicated region
      $region49: #{vector_quantizer_forward.1} parent=43 // pred_check
        %p635 = pneg %p152
      $region50: #{vector_quantizer_forward.1} parent=43 // pred_check_branch
        %637 = sbr.rel (%p635) target = $region52
      $region51: #{vector_quantizer_forward.1} parent=43 // pred_region
        %s638 = sadd.s32 %s22, %s23
        %p639 = scmp.lt.s32.totalorder %s638, 1
        %s640 = scalar_select %p639, %s638, 1
        %s641 = smul.addr %s640, 2
        %s642 = smul.addr %s641, 8
        %s643 = scalar_lea.vmem %s4, %s642
      $region52: #{vector_quantizer_forward.1} parent=43 // pred_fallthru
        _
    $region44: #{vector_quantizer_forward.1} parent=5 // pred_fallthru
      _
  $region6: #{vector_quantizer_forward.1} parent=0 // loop_footer
    %s15 = sadd.s32 1, %s11
  $region7: #{vector_quantizer_forward.1} parent=0 // loop_footer_branch
    %10 = sbr.rel target = $region3
  $region8: #{vector_quantizer_forward.1} parent=0 // loop_exit
    _

</llo_original>
